<compile_context>
chip_gen: v7x
topology: tpu7x:2x2x1
jax: 0.10.0
libtpu: 0.0.40
codegen_flags: <defaults>
</compile_context>

<pallas_src>
import functools
import numpy as np
import jax
import jax.numpy as jnp
from jax.experimental import pallas as pl
from jax.experimental.pallas import tpu as pltpu


# --------------------------------------------------------------------------
# VMEM budgeting helpers
# --------------------------------------------------------------------------
def _vmem_info():
    """Returns (pipeline-buffer byte budget, scoped vmem_limit_bytes)."""
    try:
        cap = int(pltpu.get_tpu_info().vmem_capacity_bytes)
    except Exception:
        cap = 64 * 1024 * 1024          # v7x per-TC physical VMEM (smallest)
    return (cap * 3) // 8, cap // 2      # buffers <= 3/8 cap, limit = cap/2


def _pick_batch_tile(B, row_bytes, budget):
    """Largest multiple-of-8 divisor of B whose pipelined footprint fits the
    budget; full B when B is not a multiple of 8 (full-dim exemption)."""
    if B % 8 != 0:
        return B
    best = 8
    tb = 8
    while tb <= B:
        if B % tb == 0 and tb * row_bytes <= budget:
            best = tb
        tb += 8
    return best


def _pick_row_tile(R, row_bytes, budget):
    """Largest multiple-of-8 divisor of R that keeps >= 2 row blocks (so both
    v7x TensorCores get work) and fits the VMEM budget."""
    if R % 8 != 0:
        return R
    cands = [tr for tr in range(8, R + 1, 8) if R % tr == 0 and R // tr >= 2]
    if not cands:
        return R
    best = cands[0]
    for tr in cands:
        if tr * row_bytes <= budget:
            best = max(best, tr)
    return best


# --------------------------------------------------------------------------
# Kernel 1: fused REINFORCE loss pipeline, batched over tasks.
# grid = (TASK_NUM, num_batch_blocks), both axes "parallel".
# --------------------------------------------------------------------------
def _reinforce_loss_kernel(agg_mode,
                           pref_ref, hvw_ref,               # SMEM (per-task scalars)
                           rew_ref, hv_ref, probs_ref,      # VMEM tiles
                           grew_ref, glogp_ref, lrow_ref):  # VMEM outputs
    t = pl.program_id(0)
    p0 = pref_ref[t, 0]
    p1 = pref_ref[t, 1]
    hv_w = hvw_ref[t]

    # in-kernel casts (inputs may be bf16 etc.); rew_ref is (2, tb, P)
    r0 = rew_ref[0].astype(jnp.float32)
    r1 = rew_ref[1].astype(jnp.float32)
    hv = hv_ref[...].astype(jnp.float32)                  # (tb, P)
    probs = probs_ref[...].astype(jnp.float32)             # (tb, P, T)

    if agg_mode == 1:                       # weighted sum
        agg = p0 * r0 + p1 * r1
    else:                                   # weighted Tchebycheff (z = 80.0)
        z = jnp.float32(80.0)
        agg = -jnp.maximum(p0 * (r0 - z), p1 * (r1 - z))

    group_reward = agg * (1.0 - hv_w) + hv * hv_w           # (tb, P)
    # TODO(synk): log(0) -> -inf exactly like the PyTorch reference; clamp here
    # if the sampler can ever emit an exactly-zero chosen-action probability.
    group_log_prob = jnp.sum(jnp.log(probs), axis=-1)        # (tb, P)

    p_real = group_reward.shape[1]
    pomo_mean = jnp.sum(group_reward, axis=1, keepdims=True) * (1.0 / p_real)
    advantage = group_reward - pomo_mean
    loss_elems = -advantage * group_log_prob                  # (tb, P)

    grew_ref[...] = group_reward
    glogp_ref[...] = group_log_prob
    # fused partial reduction: per-batch-row loss sums (tiny (tb, 1) store)
    lrow_ref[...] = jnp.sum(loss_elems, axis=-1, keepdims=True)


def reinforce_loss_multi(pref, hv_w, reward, hv_reward, group_prob_list, agg=1):
    """Batched over tasks.

    pref: (Nt, 2), hv_w: (Nt,), reward: (Nt, B, P, 2), hv_reward: (Nt, B, P),
    group_prob_list: (Nt, B, P, T).
    Returns loss (Nt,), group_reward (Nt, B, P), group_log_prob (Nt, B, P).
    """
    Nt, B, P, _ = reward.shape
    T = group_prob_list.shape[-1]

    # one small transpose in glue so each objective slice is a contiguous,
    # lane-dense (B, P) plane: (Nt, B, P, 2) -> (Nt, 2, B, P)
    rew = jnp.moveaxis(reward, -1, 1)

    budget, vmem_limit = _vmem_info()
    # double-buffered bytes per batch row: probs + rew + hv inputs, 2 f32
    # (tb, P) outputs, 1 loss lane
    row_bytes = 2 * (group_prob_list.dtype.itemsize * P * T
                     + reward.dtype.itemsize * 2 * P
                     + hv_reward.dtype.itemsize * P
                     + 4 * (2 * P + 1))
    tb = _pick_batch_tile(B, row_bytes, budget)
    nb = B // tb

    smem = pl.BlockSpec(memory_space=pltpu.MemorySpace.SMEM)
    # last two block dims equal the full array dims -> no (8,128) padding / DMA
    spec_rew = pl.BlockSpec((None, 2, tb, P), lambda t, b: (t, 0, b, 0))
    spec_bp = pl.BlockSpec((None, tb, P), lambda t, b: (t, b, 0))
    spec_pr = pl.BlockSpec((None, tb, P, T), lambda t, b: (t, b, 0, 0))
    spec_lrow = pl.BlockSpec((None, tb, 1), lambda t, b: (t, b, 0))

    grew, glogp, lrow = pl.pallas_call(
        functools.partial(_reinforce_loss_kernel, agg),
        out_shape=(jax.ShapeDtypeStruct((Nt, B, P), jnp.float32),
                   jax.ShapeDtypeStruct((Nt, B, P), jnp.float32),
                   jax.ShapeDtypeStruct((Nt, B, 1), jnp.float32)),
        grid=(Nt, nb),
        in_specs=[smem, smem, spec_rew, spec_bp, spec_pr],
        out_specs=(spec_bp, spec_bp, spec_lrow),
        compiler_params=pltpu.CompilerParams(
            dimension_semantics=("parallel", "parallel"),
            vmem_limit_bytes=vmem_limit),
    )(jnp.asarray(pref, dtype=jnp.float32).reshape(Nt, 2),
      jnp.asarray(hv_w, dtype=jnp.float32).reshape(Nt),
      rew, hv_reward, group_prob_list)

    loss = jnp.sum(lrow[:, :, 0], axis=1) * (1.0 / (B * P))
    return loss, grew, glogp


def reinforce_loss(pref, hv_w, reward, hv_reward, group_prob_list, agg=1):
    """Single-task convenience wrapper (matches the per-task call in forward())."""
    loss, grew, glogp = reinforce_loss_multi(
        jnp.reshape(pref, (1, -1)), jnp.reshape(hv_w, (1,)),
        reward[None], hv_reward[None], group_prob_list[None], agg=agg)
    return loss[0], grew[0], glogp[0]


# --------------------------------------------------------------------------
# Kernel 2: Reptile meta-update of actor weights
#   model <- orig + (mean_over_tasks(task_w) - orig) * meta_lr
# grid = (R_blocks "parallel", TASK_NUM "arbitrary"); running sum over tasks
# in a VMEM accumulator; output aliases the orig buffer (in-place update).
# --------------------------------------------------------------------------
def _reptile_update_kernel(inv_tn, lr_ref, orig_ref, taskw_ref, out_ref, acc_ref):
    t = pl.program_id(1)

    @pl.when(t == 0)
    def _():
        acc_ref[...] = jnp.zeros_like(acc_ref)

    acc_ref[...] += taskw_ref[...].astype(jnp.float32)

    @pl.when(t == pl.num_programs(1) - 1)
    def _():
        lr = lr_ref[0]
        orig = orig_ref[...].astype(jnp.float32)
        out_ref[...] = (orig + (acc_ref[...] * inv_tn - orig) * lr).astype(out_ref.dtype)


def reptile_meta_update(meta_lr, orig_flat, task_flat):
    """orig_flat: (R, L), task_flat: (TASK_NUM, R, L).

    Callers should present a wide lane dim (L >= 512 recommended) when
    flattening the weights.  NOTE: orig_flat is donated (in-place update via
    input_output_aliases) — do not reuse it after this call.
    """
    Tn, R, L = task_flat.shape
    budget, vmem_limit = _vmem_info()
    # double-buffered task/orig/out blocks + f32 accumulator, bytes per row
    row_bytes = L * (2 * (task_flat.dtype.itemsize + 2 * orig_flat.dtype.itemsize) + 4)
    tr = _pick_row_tile(R, row_bytes, budget)
    nr = R // tr

    smem = pl.BlockSpec(memory_space=pltpu.MemorySpace.SMEM)
    orig_spec = pl.BlockSpec((tr, L), lambda r, t: (r, 0))
    task_spec = pl.BlockSpec((None, tr, L), lambda r, t: (t, r, 0))
    out_spec = pl.BlockSpec((tr, L), lambda r, t: (r, 0))

    out = pl.pallas_call(
        functools.partial(_reptile_update_kernel, 1.0 / Tn),
        out_shape=jax.ShapeDtypeStruct((R, L), orig_flat.dtype),
        grid=(nr, Tn),
        in_specs=[smem, orig_spec, task_spec],
        out_specs=out_spec,
        scratch_shapes=[pltpu.VMEM((tr, L), jnp.float32)],
        input_output_aliases={1: 0},          # in-place update of orig weights
        compiler_params=pltpu.CompilerParams(
            dimension_semantics=("parallel", "arbitrary"),
            vmem_limit_bytes=vmem_limit),
    )(jnp.asarray(meta_lr, jnp.float32).reshape(1), orig_flat, task_flat)
    return out


# --------------------------------------------------------------------------
# Glue: preference-weighted neighbor selection (torch.topk + gather path).
# TODO(synk): top-k sort has no Pallas TPU primitive; kept in plain JAX glue.
# --------------------------------------------------------------------------
def select_neighbors(pref, sols, sols_mask, neighbor):
    ws = (pref[None, None, :] * sols).sum(-1)                 # (B, S)
    _, ind = jax.lax.top_k(ws, neighbor)                      # (B, NB)
    sel = jnp.take_along_axis(sols, ind[:, :, None], axis=1)  # (B, NB, 2)
    sel_mask = jnp.take_along_axis(sols_mask, ind, axis=1)    # (B, NB)
    return sel, sel_mask


# TODO(synk): environment rollout / multinomial action sampling, Adam optimizer
# step + autograd, hypervolume (hvwfg) calls and update_EP non-dominated-set
# bookkeeping are host-side control flow with no Pallas equivalent.


if __name__ == "__main__":
    key = jax.random.PRNGKey(0)
    B, P, T, NOBJ = 2, 8, 8, 2          # TRAIN_BATCH_SIZE, pomo size, decode steps
    TASK_NUM = 3
    NEIGHBOR = 4
    S = 10                              # external population size
    ks = iter(jax.random.split(key, 16))

    # deterministic "random" inputs standing in for one inner-loop iteration
    # (all tasks batched into one kernel call)
    pref_raw = jax.random.uniform(next(ks), (TASK_NUM, NOBJ), minval=0.1, maxval=1.0)
    pref = pref_raw / pref_raw.sum(-1, keepdims=True)          # Dirichlet(1,1) stand-in
    hv_w = jax.random.uniform(next(ks), (TASK_NUM,))
    reward = jax.random.uniform(next(ks), (TASK_NUM, B, P, NOBJ), minval=0.0, maxval=80.0)
    hv_reward = jax.random.uniform(next(ks), (TASK_NUM, B, P))
    probs = jax.random.uniform(next(ks), (TASK_NUM, B, P, T), minval=0.05, maxval=1.0)

    pref_n = np.asarray(pref)
    hvw_n = np.asarray(hv_w)
    rew_n = np.asarray(reward)
    hv_n = np.asarray(hv_reward)
    pr_n = np.asarray(probs)

    for agg_mode in (1, 2):
        loss, grew, glogp = reinforce_loss_multi(pref, hv_w, reward, hv_reward,
                                                 probs, agg=agg_mode)
        jax.block_until_ready(loss)

        # pure-numpy reference
        if agg_mode == 1:
            agg_r = (pref_n[:, None, None, :] * rew_n).sum(-1)
        else:
            agg_r = -((pref_n[:, None, None, :] * (rew_n - 80.0)).max(-1))
        grew_r = agg_r * (1.0 - hvw_n[:, None, None]) + hv_n * hvw_n[:, None, None]
        glogp_r = np.log(pr_n).sum(-1)
        adv_r = grew_r - grew_r.mean(2, keepdims=True)
        loss_r = (-adv_r * glogp_r).mean(axis=(1, 2))
        assert np.allclose(np.asarray(grew), grew_r, rtol=1e-5, atol=1e-5)
        assert np.allclose(np.asarray(glogp), glogp_r, rtol=1e-5, atol=1e-5)
        assert np.allclose(np.asarray(loss), loss_r, rtol=1e-5, atol=1e-4)

    # single-task wrapper (the per-task signature the original loop uses)
    l0, g0, lp0 = reinforce_loss(pref[0], hv_w[0:1], reward[0], hv_reward[0],
                                 probs[0], agg=1)
    jax.block_until_ready(l0)
    agg0 = (pref_n[0][None, None, :] * rew_n[0]).sum(-1)
    grew0 = agg0 * (1.0 - hvw_n[0]) + hv_n[0] * hvw_n[0]
    glogp0 = np.log(pr_n[0]).sum(-1)
    loss0 = (-(grew0 - grew0.mean(1, keepdims=True)) * glogp0).mean()
    assert np.allclose(np.asarray(g0), grew0, rtol=1e-5, atol=1e-5)
    assert np.allclose(float(l0), loss0, rtol=1e-5, atol=1e-4)

    # neighbor selection glue (pref-weighted topk + gather), as in forward()
    sols = jax.random.uniform(next(ks), (B, S, NOBJ), minval=0.0, maxval=80.0)
    sols_mask = jnp.zeros((B, S), jnp.float32)
    sel, sel_mask = select_neighbors(pref[0], sols, sols_mask, NEIGHBOR)
    jax.block_until_ready(sel)

    # Reptile meta-update kernel: synthetic flattened actor weights, wide lane
    # dim (R x 512) so stores are fully lane-dense
    R, L = 256, 512
    orig = jax.random.normal(next(ks), (R, L), jnp.float32)
    taskw = orig[None] + 0.01 * jax.random.normal(next(ks), (TASK_NUM, R, L), jnp.float32)
    meta_lr = 0.9
    # snapshot BEFORE the call: the kernel output aliases (donates) the orig buffer
    orig_n = np.asarray(orig)
    taskw_n = np.asarray(taskw)
    new_w = reptile_meta_update(meta_lr, orig, taskw)
    jax.block_until_ready(new_w)
    new_w_ref = orig_n + (taskw_n.mean(0) - orig_n) * meta_lr
    assert np.allclose(np.asarray(new_w), new_w_ref, rtol=1e-5, atol=1e-5)

    print("KERNEL_OK")
</pallas_src>

<mosaic_0001>
module attributes {stable_mosaic.version = 11 : i64} {
  func.func @_reinforce_loss_kernel(%arg0: i32, %arg1: i32, %arg2: memref<3x2xf32, #tpu.memory_space<smem>>, %arg3: memref<3xf32, #tpu.memory_space<smem>>, %arg4: memref<1x2x2x8xf32, #tpu.memory_space<vmem>>, %arg5: memref<1x2x8xf32, #tpu.memory_space<vmem>>, %arg6: memref<1x2x8x8xf32, #tpu.memory_space<vmem>>, %arg7: memref<1x2x8xf32, #tpu.memory_space<vmem>>, %arg8: memref<1x2x8xf32, #tpu.memory_space<vmem>>, %arg9: memref<1x2x1xf32, #tpu.memory_space<vmem>>) attributes {dimension_semantics = [#tpu.dimension_semantics<parallel>, #tpu.dimension_semantics<parallel>], iteration_bounds = array<i64: 3, 1>, scalar_prefetch = 0 : i64, scratch_operands = 0 : i64, tpu.core_type = #tpu.core_type<tc>, window_params = [{transform_indices = @transform_0, window_bounds = array<i64: 3, 2>}, {transform_indices = @transform_1, window_bounds = array<i64: 3>}, {transform_indices = @transform_2, window_bounds = array<i64: 1, 2, 2, 8>}, {transform_indices = @transform_3, window_bounds = array<i64: 1, 2, 8>}, {transform_indices = @transform_4, window_bounds = array<i64: 1, 2, 8, 8>}, {transform_indices = @transform_5, window_bounds = array<i64: 1, 2, 8>}, {transform_indices = @transform_6, window_bounds = array<i64: 1, 2, 8>}, {transform_indices = @transform_7, window_bounds = array<i64: 1, 2, 1>}]} {
    %0 = arith.index_cast %arg0 : i32 to index
    %c0 = arith.constant 0 : index
    %1 = memref.load %arg2[%0, %c0] : memref<3x2xf32, #tpu.memory_space<smem>>
    %2 = arith.index_cast %arg0 : i32 to index
    %c1 = arith.constant 1 : index
    %3 = memref.load %arg2[%2, %c1] : memref<3x2xf32, #tpu.memory_space<smem>>
    %4 = arith.index_cast %arg0 : i32 to index
    %5 = memref.load %arg3[%4] : memref<3xf32, #tpu.memory_space<smem>>
    %c0_0 = arith.constant 0 : index
    %c0_1 = arith.constant 0 : index
    %c0_2 = arith.constant 0 : index
    %c0_3 = arith.constant 0 : index
    %6 = vector.load %arg4[%c0_0, %c0_1, %c0_2, %c0_3] : memref<1x2x2x8xf32, #tpu.memory_space<vmem>>, vector<1x1x2x8xf32>
    %7 = vector.shape_cast %6 : vector<1x1x2x8xf32> to vector<2x8xf32>
    %c0_4 = arith.constant 0 : index
    %c1_5 = arith.constant 1 : index
    %c0_6 = arith.constant 0 : index
    %c0_7 = arith.constant 0 : index
    %8 = vector.load %arg4[%c0_4, %c1_5, %c0_6, %c0_7] : memref<1x2x2x8xf32, #tpu.memory_space<vmem>>, vector<1x1x2x8xf32>
    %9 = vector.shape_cast %8 : vector<1x1x2x8xf32> to vector<2x8xf32>
    %c0_8 = arith.constant 0 : index
    %c0_9 = arith.constant 0 : index
    %c0_10 = arith.constant 0 : index
    %10 = vector.load %arg5[%c0_8, %c0_9, %c0_10] : memref<1x2x8xf32, #tpu.memory_space<vmem>>, vector<1x2x8xf32>
    %11 = vector.shape_cast %10 : vector<1x2x8xf32> to vector<2x8xf32>
    %c0_11 = arith.constant 0 : index
    %c0_12 = arith.constant 0 : index
    %c0_13 = arith.constant 0 : index
    %c0_14 = arith.constant 0 : index
    %12 = vector.load %arg6[%c0_11, %c0_12, %c0_13, %c0_14] : memref<1x2x8x8xf32, #tpu.memory_space<vmem>>, vector<1x2x8x8xf32>
    %13 = vector.shape_cast %12 : vector<1x2x8x8xf32> to vector<2x8x8xf32>
    %14 = vector.broadcast %1 : f32 to vector<2x8xf32>
    %15 = arith.mulf %14, %7 : vector<2x8xf32>
    %16 = vector.broadcast %3 : f32 to vector<2x8xf32>
    %17 = arith.mulf %16, %9 : vector<2x8xf32>
    %18 = arith.addf %15, %17 : vector<2x8xf32>
    %cst = arith.constant 1.000000e+00 : f32
    %19 = arith.subf %cst, %5 : f32
    %20 = vector.broadcast %19 : f32 to vector<2x8xf32>
    %21 = arith.mulf %18, %20 : vector<2x8xf32>
    %22 = vector.broadcast %5 : f32 to vector<2x8xf32>
    %23 = arith.mulf %11, %22 : vector<2x8xf32>
    %24 = arith.addf %21, %23 : vector<2x8xf32>
    %25 = math.log %13 : vector<2x8x8xf32>
    %cst_15 = arith.constant dense<0.000000e+00> : vector<2x8xf32>
    %26 = vector.multi_reduction <add>, %25, %cst_15 [2] : vector<2x8x8xf32> to vector<2x8xf32>
    %cst_16 = arith.constant dense<0.000000e+00> : vector<2xf32>
    %27 = vector.multi_reduction <add>, %24, %cst_16 [1] : vector<2x8xf32> to vector<2xf32>
    %28 = vector.shape_cast %27 : vector<2xf32> to vector<2x1xf32>
    %cst_17 = arith.constant 1.250000e-01 : f32
    %29 = vector.broadcast %cst_17 : f32 to vector<2x1xf32>
    %30 = arith.mulf %28, %29 : vector<2x1xf32>
    %31 = vector.broadcast %30 : vector<2x1xf32> to vector<2x8xf32>
    %32 = arith.subf %24, %31 : vector<2x8xf32>
    %cst_18 = arith.constant 0.000000e+00 : f32
    %33 = vector.broadcast %cst_18 : f32 to vector<2x8xf32>
    %34 = arith.subf %33, %32 : vector<2x8xf32>
    %35 = arith.mulf %34, %26 : vector<2x8xf32>
    %c0_19 = arith.constant 0 : index
    %c0_20 = arith.constant 0 : index
    %c0_21 = arith.constant 0 : index
    %36 = vector.load %arg7[%c0_19, %c0_20, %c0_21] : memref<1x2x8xf32, #tpu.memory_space<vmem>>, vector<1x2x8xf32>
    %37 = vector.shape_cast %36 : vector<1x2x8xf32> to vector<2x8xf32>
    %38 = vector.shape_cast %24 : vector<2x8xf32> to vector<1x2x8xf32>
    tpu.vector_store %arg7[%c0_19, %c0_20, %c0_21], %38 {strides = array<i32>} : memref<1x2x8xf32, #tpu.memory_space<vmem>>, vector<1x2x8xf32>,
    %c0_22 = arith.constant 0 : index
    %c0_23 = arith.constant 0 : index
    %c0_24 = arith.constant 0 : index
    %39 = vector.load %arg8[%c0_22, %c0_23, %c0_24] : memref<1x2x8xf32, #tpu.memory_space<vmem>>, vector<1x2x8xf32>
    %40 = vector.shape_cast %39 : vector<1x2x8xf32> to vector<2x8xf32>
    %41 = vector.shape_cast %26 : vector<2x8xf32> to vector<1x2x8xf32>
    tpu.vector_store %arg8[%c0_22, %c0_23, %c0_24], %41 {strides = array<i32>} : memref<1x2x8xf32, #tpu.memory_space<vmem>>, vector<1x2x8xf32>,
    %cst_25 = arith.constant dense<0.000000e+00> : vector<2xf32>
    %42 = vector.multi_reduction <add>, %35, %cst_25 [1] : vector<2x8xf32> to vector<2xf32>
    %43 = vector.shape_cast %42 : vector<2xf32> to vector<2x1xf32>
    %c0_26 = arith.constant 0 : index
    %c0_27 = arith.constant 0 : index
    %c0_28 = arith.constant 0 : index
    %44 = vector.load %arg9[%c0_26, %c0_27, %c0_28] : memref<1x2x1xf32, #tpu.memory_space<vmem>>, vector<1x2x1xf32>
    %45 = vector.shape_cast %44 : vector<1x2x1xf32> to vector<2x1xf32>
    %46 = vector.shape_cast %43 : vector<2x1xf32> to vector<1x2x1xf32>
    tpu.vector_store %arg9[%c0_26, %c0_27, %c0_28], %46 {strides = array<i32>} : memref<1x2x1xf32, #tpu.memory_space<vmem>>, vector<1x2x1xf32>,
    return
  }
  func.func @transform_0(%arg0: i32, %arg1: i32) -> (i32, i32) {
    %c0_i32 = arith.constant 0 : i32
    %c0_i32_0 = arith.constant 0 : i32
    %c0_i32_1 = arith.constant 0 : i32
    return %c0_i32, %c0_i32_0 : i32, i32
  }
  func.func @transform_1(%arg0: i32, %arg1: i32) -> i32 {
    %c0_i32 = arith.constant 0 : i32
    %c0_i32_0 = arith.constant 0 : i32
    return %c0_i32 : i32
  }
  func.func @transform_2(%arg0: i32, %arg1: i32) -> (i32, i32, i32, i32) {
    %c0_i32 = arith.constant 0 : i32
    %c0_i32_0 = arith.constant 0 : i32
    %c0_i32_1 = arith.constant 0 : i32
    return %arg0, %c0_i32, %arg1, %c0_i32_0 : i32, i32, i32, i32
  }
  func.func @transform_3(%arg0: i32, %arg1: i32) -> (i32, i32, i32) {
    %c0_i32 = arith.constant 0 : i32
    %c0_i32_0 = arith.constant 0 : i32
    return %arg0, %arg1, %c0_i32 : i32, i32, i32
  }
  func.func @transform_4(%arg0: i32, %arg1: i32) -> (i32, i32, i32, i32) {
    %c0_i32 = arith.constant 0 : i32
    %c0_i32_0 = arith.constant 0 : i32
    %c0_i32_1 = arith.constant 0 : i32
    return %arg0, %arg1, %c0_i32, %c0_i32_0 : i32, i32, i32, i32
  }
  func.func @transform_5(%arg0: i32, %arg1: i32) -> (i32, i32, i32) {
    %c0_i32 = arith.constant 0 : i32
    %c0_i32_0 = arith.constant 0 : i32
    return %arg0, %arg1, %c0_i32 : i32, i32, i32
  }
  func.func @transform_6(%arg0: i32, %arg1: i32) -> (i32, i32, i32) {
    %c0_i32 = arith.constant 0 : i32
    %c0_i32_0 = arith.constant 0 : i32
    return %arg0, %arg1, %c0_i32 : i32, i32, i32
  }
  func.func @transform_7(%arg0: i32, %arg1: i32) -> (i32, i32, i32) {
    %c0_i32 = arith.constant 0 : i32
    %c0_i32_0 = arith.constant 0 : i32
    return %arg0, %arg1, %c0_i32 : i32, i32, i32
  }
}

</mosaic_0001>

<llo_original>
// kernel: tpu_custom_call.1
$region0: #{tpu_custom_call.1}
  #allocation0 [shape = 'u32[]', space=smem, size = 0x4, offset = 0x4, fixed_abs, tag = 'smem constant byte address 0x4 - core index']
  #allocation1 [shape = 'u32[144,128]{1,0:T(1,128)}', space=vmem, size = 0x12000, scoped, tag = 'internal scratch']
  %s0 = inlined_call_operand.vmem [shape: f32[3,2], index: 0, kind: input, shape index: {}]
  %s1 = inlined_call_operand.vmem [shape: f32[3], index: 1, kind: input, shape index: {}]
  %s2 = inlined_call_operand.vmem [shape: f32[3,2,2,8], index: 2, kind: input, shape index: {}]
  %s3 = inlined_call_operand.hbm [shape: f32[3,2,8], index: 3, kind: input, shape index: {}]
  %s4 = inlined_call_operand.hbm [shape: f32[3,2,8,8], index: 4, kind: input, shape index: {}]
  %s5 = inlined_call_operand.hbm [shape: f32[3,2,8], index: 5, kind: output, shape index: {0}]
  %s6 = inlined_call_operand.hbm [shape: f32[3,2,8], index: 6, kind: output, shape index: {1}]
  %s7 = inlined_call_operand.vmem [shape: f32[3,2,1], index: 7, kind: output, shape index: {2}]
  %8 = xla_tuple %s5, %s6, %s7
  %s9 = sld [smem:[#allocation0]]
  $region85: #{tpu_custom_call.1} parent=0
    _
  %s11 = ssub.s32 1, %s9
  %s12 = scalar_select 0, %s11, %s9
  $region1: #{tpu_custom_call.1} parent=0
    #allocation2 [shape = 'u8[2048]{0}', space=smem, size = 0x800, scoped, tag = 'input window, operand 0, single buffered']
    #allocation3 [shape = 's32[2]{0}', space=sflag, size = 0x8, scoped, tag = 'scoped memory for tpu_custom_call.1']
    #allocation4 [shape = 's32[2]{0}', space=sflag, size = 0x8, scoped, tag = 'scoped memory for tpu_custom_call.1']
    #allocation5 [shape = 's32[2]{0}', space=sflag, size = 0x8, scoped, tag = 'scoped memory for tpu_custom_call.1']
    #allocation6 [shape = 'u8[512]{0}', space=smem, size = 0x200, scoped, tag = 'input window, operand 1, single buffered']
    #allocation7 [shape = 's32[1]{0}', space=sflag, size = 0x4, scoped, tag = 'scoped memory for tpu_custom_call.1']
    #allocation8 [shape = 'u8[2048]{0}', space=vmem, size = 0x800, scoped, tag = 'input window, operand 3']
    #allocation9 [shape = 'u8[16384]{0}', space=vmem, size = 0x4000, scoped, tag = 'input window, operand 4']
    #allocation10 [shape = 's32[2]{0}', space=sflag, size = 0x8, scoped, tag = 'scoped memory for tpu_custom_call.1']
    #allocation11 [shape = 'u8[2048]{0}', space=vmem, size = 0x800, scoped, tag = 'output window, operand 0']
    #allocation12 [shape = 'u8[2048]{0}', space=vmem, size = 0x800, scoped, tag = 'output window, operand 1']
    #allocation13 [shape = 's32[2]{0}', space=sflag, size = 0x8, scoped, tag = 'scoped memory for tpu_custom_call.1']
    %13 = vsyncpa [#allocation5], 0
    %14 = vsyncpa [#allocation7], 0
    %15 = vsyncpa [#allocation3], 0
    %s16 = scalar_lea.sflag [#allocation3], 1
    %17 = vsyncpa %s16, 0
    %18 = vsyncpa [#allocation10], 0
    %s19 = scalar_lea.sflag [#allocation10], 1
    %20 = vsyncpa %s19, 0
    %21 = vsyncpa [#allocation4], 0
    %s22 = scalar_lea.sflag [#allocation4], 1
    %23 = vsyncpa %s22, 0
    %24 = vsyncpa [#allocation13], 0
    %s25 = scalar_lea.sflag [#allocation13], 1
    %26 = vsyncpa %s25, 0
    loop: start=0, step=1, limit=5
    $region2: #{tpu_custom_call.1} parent=1 // loop_pre_header
      _
    $region3: #{tpu_custom_call.1} parent=1 // loop_header
      %s28 = sphi 0, %s32
      %p29 = scmp.ge.s32.totalorder %s28, 5
      %s35 = sphi 0, %s47
      %s36 = sphi 0, %s43
      %s37 = sphi 0, %s35
      %s38 = sphi 0, %s36
      %s39 = sphi 0, %s37
      %s40 = sphi 0, %s38
      %s48 = sphi 0, %s48
      %s50 = sphi 0, %s48
      %s51 = sphi 0, %s50
      %s65 = sphi 0, %s51
      %s69 = sphi 0, %s69
      %s71 = sphi 0, %s69
      %s72 = sphi 0, %s71
      %s86 = sphi 0, %s72
      %s94 = sphi 0, %s96
      %s97 = sphi 0, %s94
      %s98 = sphi 0, %s97
      %s114 = sphi 0, %s98
      %s122 = sphi 0, %s124
      %s125 = sphi 0, %s122
      %s126 = sphi 0, %s125
      %s142 = sphi 0, %s126
      %s150 = sphi 0, %s152
      %s153 = sphi 0, %s150
      %s154 = sphi 0, %s153
      %s170 = sphi 0, %s154
      %s178 = sphi 0, %s180
      %s181 = sphi 0, %s178
      %s182 = sphi 0, %s181
      %s198 = sphi 0, %s182
      %s206 = sphi 0, %s208
      %s209 = sphi 0, %s206
      %s210 = sphi 0, %s209
      %s226 = sphi 0, %s210
      %s234 = sphi 0, %s236
      %s237 = sphi 0, %s234
      %s238 = sphi 0, %s237
      %s254 = sphi 0, %s238
    $region4: #{tpu_custom_call.1} parent=1 // loop_header_branch
      %31 = sbr.rel (%p29) target = $region8
    $region5: #{tpu_custom_call.1} parent=1 // loop_body
      %s33 = ssub.s32 %s28, 1
      %s34 = ssub.s32 %s28, 2
      %s41 = sadd.s32 1, %s36
      %p42 = scmp.ge.s32.totalorder %s41, 1
      %s43 = scalar_select %p42, 0, %s41
      %s44 = sadd.s32 1, %s35
      %s45 = scalar_select %p42, %s44, %s35
      %p46 = scmp.ge.s32.totalorder %s45, 3
      %s47 = scalar_select %p46, 0, %s45
      %s49 = sadd.s32 %s48, 1
      %p52 = scmp.eq.s32.totalorder %s28, 2
      %p53 = scmp.ne.s32.totalorder %s48, %s50
      %p54 = scmp.eq.s32.totalorder %s28, 0
      %p55 = por %p53, %p54
      %p56 = scmp.ne.s32.totalorder %s48, %s50
      %p57 = scmp.eq.s32.totalorder %s33, 2
      %p58 = por %p56, %p57
      %p59 = scmp.ne.s32.totalorder %s50, %s51
      %p60 = scmp.eq.s32.totalorder %s33, 0
      %p61 = por %p59, %p60
      %p62 = scmp.ne.s32.totalorder %s50, %s51
      %p63 = scmp.eq.s32.totalorder %s34, 2
      %p64 = por %p62, %p63
      %p66 = scmp.ne.s32.totalorder %s51, %s65
      %p67 = scmp.eq.s32.totalorder %s34, 0
      %p68 = por %p66, %p67
      %s70 = sadd.s32 %s69, 1
      %p73 = scmp.eq.s32.totalorder %s28, 2
      %p74 = scmp.ne.s32.totalorder %s69, %s71
      %p75 = scmp.eq.s32.totalorder %s28, 0
      %p76 = por %p74, %p75
      %p77 = scmp.ne.s32.totalorder %s69, %s71
      %p78 = scmp.eq.s32.totalorder %s33, 2
      %p79 = por %p77, %p78
      %p80 = scmp.ne.s32.totalorder %s71, %s72
      %p81 = scmp.eq.s32.totalorder %s33, 0
      %p82 = por %p80, %p81
      %p83 = scmp.ne.s32.totalorder %s71, %s72
      %p84 = scmp.eq.s32.totalorder %s34, 2
      %p85 = por %p83, %p84
      %p87 = scmp.ne.s32.totalorder %s72, %s86
      %p88 = scmp.eq.s32.totalorder %s34, 0
      %p89 = por %p87, %p88
      %s90 = ssub.s32 %s35, %s47
      %s91 = ssub.s32 %s36, %s43
      %s92 = sor.u32 %s90, %s91
      %p93 = scmp.eq.s32.totalorder %s92, 0
      %s95 = sadd.s32 %s94, 1
      %s96 = scalar_select %p93, %s94, %s95
      %p99 = pneg %p93
      %p100 = scmp.eq.s32.totalorder %s28, 2
      %p101 = por %p99, %p100
      %p102 = scmp.ne.s32.totalorder %s94, %s97
      %p103 = scmp.eq.s32.totalorder %s28, 0
      %p104 = por %p102, %p103
      %p105 = scmp.ne.s32.totalorder %s94, %s97
      %p106 = scmp.eq.s32.totalorder %s33, 2
      %p107 = por %p105, %p106
      %p108 = scmp.ne.s32.totalorder %s97, %s98
      %p109 = scmp.eq.s32.totalorder %s33, 0
      %p110 = por %p108, %p109
      %p111 = scmp.ne.s32.totalorder %s97, %s98
      %p112 = scmp.eq.s32.totalorder %s34, 2
      %p113 = por %p111, %p112
      %p115 = scmp.ne.s32.totalorder %s98, %s114
      %p116 = scmp.eq.s32.totalorder %s34, 0
      %p117 = por %p115, %p116
      %s118 = ssub.s32 %s35, %s47
      %s119 = ssub.s32 %s36, %s43
      %s120 = sor.u32 %s118, %s119
      %p121 = scmp.eq.s32.totalorder %s120, 0
      %s123 = sadd.s32 %s122, 1
      %s124 = scalar_select %p121, %s122, %s123
      %p127 = pneg %p121
      %p128 = scmp.eq.s32.totalorder %s28, 2
      %p129 = por %p127, %p128
      %p130 = scmp.ne.s32.totalorder %s122, %s125
      %p131 = scmp.eq.s32.totalorder %s28, 0
      %p132 = por %p130, %p131
      %p133 = scmp.ne.s32.totalorder %s122, %s125
      %p134 = scmp.eq.s32.totalorder %s33, 2
      %p135 = por %p133, %p134
      %p136 = scmp.ne.s32.totalorder %s125, %s126
      %p137 = scmp.eq.s32.totalorder %s33, 0
      %p138 = por %p136, %p137
      %p139 = scmp.ne.s32.totalorder %s125, %s126
      %p140 = scmp.eq.s32.totalorder %s34, 2
      %p141 = por %p139, %p140
      %p143 = scmp.ne.s32.totalorder %s126, %s142
      %p144 = scmp.eq.s32.totalorder %s34, 0
      %p145 = por %p143, %p144
      %s146 = ssub.s32 %s35, %s47
      %s147 = ssub.s32 %s36, %s43
      %s148 = sor.u32 %s146, %s147
      %p149 = scmp.eq.s32.totalorder %s148, 0
      %s151 = sadd.s32 %s150, 1
      %s152 = scalar_select %p149, %s150, %s151
      %p155 = pneg %p149
      %p156 = scmp.eq.s32.totalorder %s28, 2
      %p157 = por %p155, %p156
      %p158 = scmp.ne.s32.totalorder %s150, %s153
      %p159 = scmp.eq.s32.totalorder %s28, 0
      %p160 = por %p158, %p159
      %p161 = scmp.ne.s32.totalorder %s150, %s153
      %p162 = scmp.eq.s32.totalorder %s33, 2
      %p163 = por %p161, %p162
      %p164 = scmp.ne.s32.totalorder %s153, %s154
      %p165 = scmp.eq.s32.totalorder %s33, 0
      %p166 = por %p164, %p165
      %p167 = scmp.ne.s32.totalorder %s153, %s154
      %p168 = scmp.eq.s32.totalorder %s34, 2
      %p169 = por %p167, %p168
      %p171 = scmp.ne.s32.totalorder %s154, %s170
      %p172 = scmp.eq.s32.totalorder %s34, 0
      %p173 = por %p171, %p172
      %s174 = ssub.s32 %s35, %s47
      %s175 = ssub.s32 %s36, %s43
      %s176 = sor.u32 %s174, %s175
      %p177 = scmp.eq.s32.totalorder %s176, 0
      %s179 = sadd.s32 %s178, 1
      %s180 = scalar_select %p177, %s178, %s179
      %p183 = pneg %p177
      %p184 = scmp.eq.s32.totalorder %s28, 2
      %p185 = por %p183, %p184
      %p186 = scmp.ne.s32.totalorder %s178, %s181
      %p187 = scmp.eq.s32.totalorder %s28, 0
      %p188 = por %p186, %p187
      %p189 = scmp.ne.s32.totalorder %s178, %s181
      %p190 = scmp.eq.s32.totalorder %s33, 2
      %p191 = por %p189, %p190
      %p192 = scmp.ne.s32.totalorder %s181, %s182
      %p193 = scmp.eq.s32.totalorder %s33, 0
      %p194 = por %p192, %p193
      %p195 = scmp.ne.s32.totalorder %s181, %s182
      %p196 = scmp.eq.s32.totalorder %s34, 2
      %p197 = por %p195, %p196
      %p199 = scmp.ne.s32.totalorder %s182, %s198
      %p200 = scmp.eq.s32.totalorder %s34, 0
      %p201 = por %p199, %p200
      %s202 = ssub.s32 %s35, %s47
      %s203 = ssub.s32 %s36, %s43
      %s204 = sor.u32 %s202, %s203
      %p205 = scmp.eq.s32.totalorder %s204, 0
      %s207 = sadd.s32 %s206, 1
      %s208 = scalar_select %p205, %s206, %s207
      %p211 = pneg %p205
      %p212 = scmp.eq.s32.totalorder %s28, 2
      %p213 = por %p211, %p212
      %p214 = scmp.ne.s32.totalorder %s206, %s209
      %p215 = scmp.eq.s32.totalorder %s28, 0
      %p216 = por %p214, %p215
      %p217 = scmp.ne.s32.totalorder %s206, %s209
      %p218 = scmp.eq.s32.totalorder %s33, 2
      %p219 = por %p217, %p218
      %p220 = scmp.ne.s32.totalorder %s209, %s210
      %p221 = scmp.eq.s32.totalorder %s33, 0
      %p222 = por %p220, %p221
      %p223 = scmp.ne.s32.totalorder %s209, %s210
      %p224 = scmp.eq.s32.totalorder %s34, 2
      %p225 = por %p223, %p224
      %p227 = scmp.ne.s32.totalorder %s210, %s226
      %p228 = scmp.eq.s32.totalorder %s34, 0
      %p229 = por %p227, %p228
      %s230 = ssub.s32 %s35, %s47
      %s231 = ssub.s32 %s36, %s43
      %s232 = sor.u32 %s230, %s231
      %p233 = scmp.eq.s32.totalorder %s232, 0
      %s235 = sadd.s32 %s234, 1
      %s236 = scalar_select %p233, %s234, %s235
      %p239 = pneg %p233
      %p240 = scmp.eq.s32.totalorder %s28, 2
      %p241 = por %p239, %p240
      %p242 = scmp.ne.s32.totalorder %s234, %s237
      %p243 = scmp.eq.s32.totalorder %s28, 0
      %p244 = por %p242, %p243
      %p245 = scmp.ne.s32.totalorder %s234, %s237
      %p246 = scmp.eq.s32.totalorder %s33, 2
      %p247 = por %p245, %p246
      %p248 = scmp.ne.s32.totalorder %s237, %s238
      %p249 = scmp.eq.s32.totalorder %s33, 0
      %p250 = por %p248, %p249
      %p251 = scmp.ne.s32.totalorder %s237, %s238
      %p252 = scmp.eq.s32.totalorder %s34, 2
      %p253 = por %p251, %p252
      %p255 = scmp.ne.s32.totalorder %s238, %s254
      %p256 = scmp.eq.s32.totalorder %s34, 0
      %p257 = por %p255, %p256
      %p258 = scmp.le.s32.totalorder 1, %s28
      %p259 = scmp.lt.s32.totalorder %s28, 4
      %p260 = pnand %p258, %p259
      %p261 = pneg %p260
      // Predicated region
      $region9: #{tpu_custom_call.1} parent=5 // pred_check
        _
      $region10: #{tpu_custom_call.1} parent=5 // pred_check_branch
        %263 = sbr.rel (%p260) target = $region12
      $region11: #{tpu_custom_call.1} parent=5 // pred_region
        %s264 = ssub.s32 %s28, 1
        // Predicated region
        $region13: #{tpu_custom_call.1} parent=11 // pred_check
          %p265 = pneg %p61
        $region14: #{tpu_custom_call.1} parent=11 // pred_check_branch
          %267 = sbr.rel (%p265) target = $region16
        $region15: #{tpu_custom_call.1} parent=11 // pred_region
          %s269 = ssub.s32 64, 64
          %270 = vsyncadd [#allocation5], %s269
          %s272 = sshll.u32 %s0, 4
          %s273 = int_to_ptr.vmem [resolvable:$true] %s272
          %275 = dma.vmem_to_smem %s273, 64, [#allocation2], [#allocation5]
        $region16: #{tpu_custom_call.1} parent=11 // pred_fallthru
          _
        // Predicated region
        $region17: #{tpu_custom_call.1} parent=11 // pred_check
          %p276 = pneg %p82
        $region18: #{tpu_custom_call.1} parent=11 // pred_check_branch
          %278 = sbr.rel (%p276) target = $region20
        $region19: #{tpu_custom_call.1} parent=11 // pred_region
          %s280 = ssub.s32 16, 16
          %281 = vsyncadd [#allocation7], %s280
          %s283 = sshll.u32 %s1, 4
          %s284 = int_to_ptr.vmem [resolvable:$true] %s283
          %286 = dma.vmem_to_smem %s284, 16, [#allocation6], [#allocation7]
        $region20: #{tpu_custom_call.1} parent=11 // pred_fallthru
          _
      $region12: #{tpu_custom_call.1} parent=5 // pred_fallthru
        _
      %p287 = scmp.lt.s32.totalorder %s28, 3
      // Predicated region
      $region21: #{tpu_custom_call.1} parent=5 // pred_check
        %p288 = pneg %p287
      $region22: #{tpu_custom_call.1} parent=5 // pred_check_branch
        %290 = sbr.rel (%p288) target = $region24
      $region23: #{tpu_custom_call.1} parent=5 // pred_region
        // Predicated region
        $region25: #{tpu_custom_call.1} parent=23 // pred_check
          %p291 = pneg %p104
        $region26: #{tpu_custom_call.1} parent=23 // pred_check_branch
          %293 = sbr.rel (%p291) target = $region28
        $region27: #{tpu_custom_call.1} parent=23 // pred_region
          %p294 = scmp.lt.s32.totalorder %s35, 2
          %s295 = scalar_select %p294, %s35, 2
          %p296 = scmp.lt.s32.totalorder %s36, 0
          %s297 = scalar_select %p296, %s36, 0
          %s298 = smul.addr %s295, 2
          %s299 = sadd.s32 %s297, %s298
          %s300 = smul.addr %s299, 2
          %s301 = scalar_lea.vmem %s2, %s300
        $region28: #{tpu_custom_call.1} parent=23 // pred_fallthru
          _
        // Predicated region
        $region29: #{tpu_custom_call.1} parent=23 // pred_check
          %p302 = pneg %p132
        $region30: #{tpu_custom_call.1} parent=23 // pred_check_branch
          %304 = sbr.rel (%p302) target = $region32
        $region31: #{tpu_custom_call.1} parent=23 // pred_region
          %s305 = sand.u32 %s122, 1
          %s306 = scalar_lea.sflag [#allocation3], %s305
          %s307 = sand.u32 %s122, 1
          %s308 = smul.addr %s307, 2
          %s309 = scalar_lea.vmem [#allocation8], %s308
          %s311 = ssub.s32 32, 32
          %312 = vsyncadd %s306, %s311
          %s313 = sadd.s32 %s36, %s35
          %s314 = smul.addr %s313, 32
          %s315 = scalar_lea.hbm %s3, %s314
          %s317 = sshll.u32 %s309, 4
          %s318 = int_to_ptr.vmem [resolvable:$true] %s317
          %320 = dma.hbm_to_vmem [thread:$0]  %s315, 32, %s318, %s306
        $region32: #{tpu_custom_call.1} parent=23 // pred_fallthru
          _
        // Predicated region
        $region33: #{tpu_custom_call.1} parent=23 // pred_check
          %p321 = pneg %p160
        $region34: #{tpu_custom_call.1} parent=23 // pred_check_branch
          %323 = sbr.rel (%p321) target = $region36
        $region35: #{tpu_custom_call.1} parent=23 // pred_region
          %s324 = sand.u32 %s150, 1
          %s325 = scalar_lea.sflag [#allocation10], %s324
          %s326 = sand.u32 %s150, 1
          %s327 = smul.addr %s326, 16
          %s328 = scalar_lea.vmem [#allocation9], %s327
          %s329 = smul.u32 2, %s36
          %s331 = ssub.s32 256, 256
          %332 = vsyncadd %s325, %s331
          %s333 = smul.addr %s35, 2
          %s334 = sadd.s32 %s329, %s333
          %s335 = smul.addr %s334, 128
          %s336 = scalar_lea.hbm %s4, %s335
          %s337 = sshll.u32 %s328, 4
          %s338 = int_to_ptr.vmem [resolvable:$true] %s337
          %343 = dma.hbm_to_vmem [thread:$0]  %s336, 256, %s338, %s325, 128, 128, 8
        $region36: #{tpu_custom_call.1} parent=23 // pred_fallthru
          _
      $region24: #{tpu_custom_call.1} parent=5 // pred_fallthru
        _
      %p344 = scmp.le.s32.totalorder 1, %s28
      %p345 = scmp.lt.s32.totalorder %s28, 4
      %p346 = pnand %p344, %p345
      %p347 = pneg %p346
      // Predicated region
      $region37: #{tpu_custom_call.1} parent=5 // pred_check
        _
      $region38: #{tpu_custom_call.1} parent=5 // pred_check_branch
        %349 = sbr.rel (%p346) target = $region40
      $region39: #{tpu_custom_call.1} parent=5 // pred_region
        %s350 = ssub.s32 %s28, 1
        // Predicated region
        $region41: #{tpu_custom_call.1} parent=39 // pred_check
          %p351 = pneg %p61
        $region42: #{tpu_custom_call.1} parent=39 // pred_check_branch
          %353 = sbr.rel (%p351) target = $region44
        $region43: #{tpu_custom_call.1} parent=39 // pred_region
          %354 = dma.done [#allocation5], 64
        $region44: #{tpu_custom_call.1} parent=39 // pred_fallthru
          _
        // Predicated region
        $region45: #{tpu_custom_call.1} parent=39 // pred_check
          %p355 = pneg %p82
        $region46: #{tpu_custom_call.1} parent=39 // pred_check_branch
          %357 = sbr.rel (%p355) target = $region48
        $region47: #{tpu_custom_call.1} parent=39 // pred_region
          %358 = dma.done [#allocation7], 16
        $region48: #{tpu_custom_call.1} parent=39 // pred_fallthru
          _
        %s359 = sand.u32 %s125, 1
        %s360 = scalar_lea.sflag [#allocation3], %s359
        %s361 = sand.u32 %s125, 1
        %s362 = smul.addr %s361, 2
        %s363 = scalar_lea.vmem [#allocation8], %s362
        // Predicated region
        $region49: #{tpu_custom_call.1} parent=39 // pred_check
          %p364 = pneg %p138
        $region50: #{tpu_custom_call.1} parent=39 // pred_check_branch
          %366 = sbr.rel (%p364) target = $region52
        $region51: #{tpu_custom_call.1} parent=39 // pred_region
          %367 = dma.done %s360, 32
        $region52: #{tpu_custom_call.1} parent=39 // pred_fallthru
          _
        %s368 = sand.u32 %s153, 1
        %s369 = scalar_lea.sflag [#allocation10], %s368
        %s370 = sand.u32 %s153, 1
        %s371 = smul.addr %s370, 16
        %s372 = scalar_lea.vmem [#allocation9], %s371
        // Predicated region
        $region53: #{tpu_custom_call.1} parent=39 // pred_check
          %p373 = pneg %p166
        $region54: #{tpu_custom_call.1} parent=39 // pred_check_branch
          %375 = sbr.rel (%p373) target = $region56
        $region55: #{tpu_custom_call.1} parent=39 // pred_region
          %376 = dma.done %s369, 256
        $region56: #{tpu_custom_call.1} parent=39 // pred_fallthru
          _
        %377 = sfence
        %p378 = pneg %p61
        %p379 = pneg %p58
        %p380 = pneg %p82
        %p381 = pneg %p79
        %p382 = scmp.lt.s32.totalorder %s37, 2
        %s383 = scalar_select %p382, %s37, 2
        %p384 = scmp.lt.s32.totalorder %s38, 0
        %s385 = scalar_select %p384, %s38, 0
        %s386 = smul.addr %s383, 2
        %s387 = sadd.s32 %s385, %s386
        %s388 = smul.addr %s387, 2
        %s389 = scalar_lea.vmem %s2, %s388
        %p390 = pneg %p110
        %p391 = pneg %p107
        %s392 = sand.u32 %s125, 1
        %s393 = scalar_lea.sflag [#allocation3], %s392
        %s394 = sand.u32 %s125, 1
        %s395 = smul.addr %s394, 2
        %s396 = scalar_lea.vmem [#allocation8], %s395
        %p397 = pneg %p138
        %p398 = pneg %p135
        %s399 = sand.u32 %s153, 1
        %s400 = scalar_lea.sflag [#allocation10], %s399
        %s401 = sand.u32 %s153, 1
        %s402 = smul.addr %s401, 16
        %s403 = scalar_lea.vmem [#allocation9], %s402
        %p404 = pneg %p166
        %p405 = pneg %p163
        %p406 = pneg %p194
        %p407 = pneg %p191
        %s408 = sand.u32 %s181, 1
        %s409 = scalar_lea.sflag [#allocation4], %s408
        %s410 = sand.u32 %s181, 1
        %s411 = smul.addr %s410, 2
        %s412 = scalar_lea.vmem [#allocation11], %s411
        %p413 = pneg %p222
        %p414 = pneg %p219
        %s415 = sand.u32 %s209, 1
        %s416 = scalar_lea.sflag [#allocation13], %s415
        %s417 = sand.u32 %s209, 1
        %s418 = smul.addr %s417, 2
        %s419 = scalar_lea.vmem [#allocation12], %s418
        %p420 = pneg %p250
        %p421 = pneg %p247
        %p422 = scmp.lt.s32.totalorder %s37, 2
        %s423 = scalar_select %p422, %s37, 2
        %p424 = scmp.lt.s32.totalorder %s38, 0
        %s425 = scalar_select %p424, %s38, 0
        %s426 = sadd.s32 %s425, %s423
        %s427 = smul.addr %s426, 2
        %s428 = scalar_lea.vmem %s7, %s427
        %p429 = scmp.lt.s32.totalorder %s37, 2
        %s430 = scalar_select %p429, %s37, 2
        %p431 = scmp.lt.s32.totalorder %s38, 0
        %s432 = scalar_select %p431, %s38, 0
        %s433 = smul.addr %s430, 2
        %s434 = sadd.s32 %s432, %s433
        %s435 = smul.addr %s434, 2
        %s436 = scalar_lea.vmem %s2, %s435
        %s437 = smul.u32 2, %s38
        %p438 = scmp.lt.s32.totalorder %s37, 2
        %s439 = scalar_select %p438, %s37, 2
        %p440 = scmp.lt.s32.totalorder %s38, 0
        %s441 = scalar_select %p440, %s38, 0
        %s442 = sadd.s32 %s441, %s439
        %s443 = smul.addr %s442, 2
        %s444 = scalar_lea.vmem %s7, %s443
        %s445 = smul.u32 %s37, 128
        %s446 = sld [smem:[#allocation2 + %s445]]
        %s447 = sadd.s32 %s445, 1
        %s448 = sld [smem:[#allocation2 + %s447]]
        %s449 = sld [smem:[#allocation6 + %s37]]
        %v450 = vld [vmem:[%s436] sm:$0x3]
        %s451 = scalar_lea.vmem %s436, 2
        %v452 = vld [vmem:[%s451] sm:$0x3]
        %v453 = vld [vmem:[%s363] sm:$0x3]
        %v454 = vld [vmem:[%s372] sm:$0xff]
        %v455 = vld [vmem:[%s372 + $0x8] sm:$0xff]
        %v456 = vstv %s446
        %v457 = vmul.f32 %v456, %v450
        %v458 = vstv %s448
        %v459 = vmul.f32 %v458, %v452
        %v460 = vadd.f32 %v457, %v459
        %s461 = ssub.f32 1.0, %s449
        %v462 = vstv %s461
        %v463 = vmul.f32 %v460, %v462
        %v464 = vstv %s449
        %v465 = vmul.f32 %v453, %v464
        %v466 = vadd.f32 %v463, %v465
        %v467 = vlog2.pop %v454
        %v468 = vmul.f32 %v467, 0.6931472
        %v469 = vlog2.pop %v455
        %v470 = vmul.f32 %v469, 0.6931472
        %vm471 = vcmask 64512
        %v472 = vsel %vm471, %v468, 0.0
        %473 = vadd.xlane.f32.xlu0 %v472
        %v474 = vpop.xlane.xlu0 %473
        %v475 = vsel %vm471, %v470, 0.0
        %476 = vadd.xlane.f32.xlu0 %v475
        %v477 = vpop.xlane.xlu0 %476
        %vm478 = vcmask 58368
        %v479 = vsel %vm478, %v466, 0.0
        %480 = vadd.xlane.f32.xlu0 %v479
        %v481 = vpop.xlane.xlu0 %480
        %v482 = vmul.f32 %v481, 0.125
        %v483 = vsub.f32 %v466, %v482
        %v484 = vsub.f32 0.0, %v483
        %v487 = vlaneseq
        %v488 = vand.u32 %v487, 127
        %v489 = vlaneseq
        %v490 = vshrl.u32 %v489, 7
        %v491 = vsub.s32 %v488, %v490
        %v492 = vrot.slane %v474, %v491
        %v493 = vlaneseq
        %v494 = vshrl.u32 %v493, 7
        %v495 = vsub.s32 %v488, %v494
        %v496 = vrot.slane %v477, %v495
        %vm497 = vcmask 1041409
        %v498 = vsel %vm497, %v496, %v492
        %v500 = vmul.f32 %v484, %v498
        %501 = vst.msk [vmem:[%s412] sm:$0x3] %vm478, %v466
        %502 = vst.msk [vmem:[%s419] sm:$0x3] %vm478, %v498
        %v503 = vsel %vm478, %v500, 0.0
        %504 = vadd.xlane.f32.xlu0 %v503
        %v505 = vpop.xlane.xlu0 %504
        %vm506 = vcmask 1024
        %507 = vst.msk [vmem:[%s444] sm:$0x3] %vm506, %v505
        %s508 = sand.u32 %s181, 1
        %s509 = scalar_lea.sflag [#allocation4], %s508
        %s510 = sand.u32 %s181, 1
        %s511 = smul.addr %s510, 2
        %s512 = scalar_lea.vmem [#allocation11], %s511
        %s513 = sand.u32 %s209, 1
        %s514 = scalar_lea.sflag [#allocation13], %s513
        %s515 = sand.u32 %s209, 1
        %s516 = smul.addr %s515, 2
        %s517 = scalar_lea.vmem [#allocation12], %s516
        %p518 = scmp.lt.s32.totalorder %s37, 2
        %s519 = scalar_select %p518, %s37, 2
        %p520 = scmp.lt.s32.totalorder %s38, 0
        %s521 = scalar_select %p520, %s38, 0
        %s522 = sadd.s32 %s521, %s519
        %s523 = smul.addr %s522, 2
        %s524 = scalar_lea.vmem %s7, %s523
        // Predicated region
        $region57: #{tpu_custom_call.1} parent=39 // pred_check
          %p525 = pneg %p191
        $region58: #{tpu_custom_call.1} parent=39 // pred_check_branch
          %527 = sbr.rel (%p525) target = $region60
        $region59: #{tpu_custom_call.1} parent=39 // pred_region
          %s529 = ssub.s32 32, 32
          %530 = vsyncadd %s509, %s529
          %s531 = sadd.s32 %s38, %s37
          %s532 = smul.addr %s531, 32
          %s533 = scalar_lea.hbm %s5, %s532
          %s535 = sshll.u32 %s512, 4
          %s536 = int_to_ptr.vmem [resolvable:$true] %s535
          %538 = dma.vmem_to_hbm [thread:$0]  %s536, 32, %s533, %s509
        $region60: #{tpu_custom_call.1} parent=39 // pred_fallthru
          _
        // Predicated region
        $region61: #{tpu_custom_call.1} parent=39 // pred_check
          %p539 = pneg %p219
        $region62: #{tpu_custom_call.1} parent=39 // pred_check_branch
          %541 = sbr.rel (%p539) target = $region64
        $region63: #{tpu_custom_call.1} parent=39 // pred_region
          %s543 = ssub.s32 32, 32
          %544 = vsyncadd %s514, %s543
          %s545 = sadd.s32 %s38, %s37
          %s546 = smul.addr %s545, 32
          %s547 = scalar_lea.hbm %s6, %s546
          %s549 = sshll.u32 %s517, 4
          %s550 = int_to_ptr.vmem [resolvable:$true] %s549
          %552 = dma.vmem_to_hbm [thread:$0]  %s550, 32, %s547, %s514
        $region64: #{tpu_custom_call.1} parent=39 // pred_fallthru
          _
        // Predicated region
        $region65: #{tpu_custom_call.1} parent=39 // pred_check
          %p553 = pneg %p247
        $region66: #{tpu_custom_call.1} parent=39 // pred_check_branch
          %555 = sbr.rel (%p553) target = $region68
        $region67: #{tpu_custom_call.1} parent=39 // pred_region
          _
        $region68: #{tpu_custom_call.1} parent=39 // pred_fallthru
          _
      $region40: #{tpu_custom_call.1} parent=5 // pred_fallthru
        _
      %p556 = scmp.le.s32.totalorder 2, %s28
      // Predicated region
      $region69: #{tpu_custom_call.1} parent=5 // pred_check
        %p557 = pneg %p556
      $region70: #{tpu_custom_call.1} parent=5 // pred_check_branch
        %559 = sbr.rel (%p557) target = $region72
      $region71: #{tpu_custom_call.1} parent=5 // pred_region
        %s560 = ssub.s32 %s28, 2
        // Predicated region
        $region73: #{tpu_custom_call.1} parent=71 // pred_check
          %p561 = pneg %p197
        $region74: #{tpu_custom_call.1} parent=71 // pred_check_branch
          %563 = sbr.rel (%p561) target = $region76
        $region75: #{tpu_custom_call.1} parent=71 // pred_region
          %s564 = sand.u32 %s182, 1
          %s565 = scalar_lea.sflag [#allocation4], %s564
          %s566 = sand.u32 %s182, 1
          %s567 = smul.addr %s566, 2
          %s568 = scalar_lea.vmem [#allocation11], %s567
          %569 = dma.done %s565, 32
        $region76: #{tpu_custom_call.1} parent=71 // pred_fallthru
          _
        // Predicated region
        $region77: #{tpu_custom_call.1} parent=71 // pred_check
          %p570 = pneg %p225
        $region78: #{tpu_custom_call.1} parent=71 // pred_check_branch
          %572 = sbr.rel (%p570) target = $region80
        $region79: #{tpu_custom_call.1} parent=71 // pred_region
          %s573 = sand.u32 %s210, 1
          %s574 = scalar_lea.sflag [#allocation13], %s573
          %s575 = sand.u32 %s210, 1
          %s576 = smul.addr %s575, 2
          %s577 = scalar_lea.vmem [#allocation12], %s576
          %578 = dma.done %s574, 32
        $region80: #{tpu_custom_call.1} parent=71 // pred_fallthru
          _
        // Predicated region
        $region81: #{tpu_custom_call.1} parent=71 // pred_check
          %p579 = pneg %p253
        $region82: #{tpu_custom_call.1} parent=71 // pred_check_branch
          %581 = sbr.rel (%p579) target = $region84
        $region83: #{tpu_custom_call.1} parent=71 // pred_region
          %p582 = scmp.lt.s32.totalorder %s39, 2
          %s583 = scalar_select %p582, %s39, 2
          %p584 = scmp.lt.s32.totalorder %s40, 0
          %s585 = scalar_select %p584, %s40, 0
          %s586 = sadd.s32 %s585, %s583
          %s587 = smul.addr %s586, 2
          %s588 = scalar_lea.vmem %s7, %s587
        $region84: #{tpu_custom_call.1} parent=71 // pred_fallthru
          _
      $region72: #{tpu_custom_call.1} parent=5 // pred_fallthru
        _
    $region6: #{tpu_custom_call.1} parent=1 // loop_footer
      %s32 = sadd.s32 1, %s28
    $region7: #{tpu_custom_call.1} parent=1 // loop_footer_branch
      %27 = sbr.rel target = $region3
    $region8: #{tpu_custom_call.1} parent=1 // loop_exit
      _
    %589 = vsyncpa [#allocation3], 1
    %s590 = scalar_lea.sflag [#allocation3], 1
    %591 = vsyncpa %s590, 1
    %592 = vsyncpa [#allocation10], 1
    %s593 = scalar_lea.sflag [#allocation10], 1
    %594 = vsyncpa %s593, 1
    %595 = vsyncpa [#allocation4], 1
    %s596 = scalar_lea.sflag [#allocation4], 1
    %597 = vsyncpa %s596, 1
    %598 = vsyncpa [#allocation13], 1
    %s599 = scalar_lea.sflag [#allocation13], 1
    %600 = vsyncpa %s599, 1
    %601 = vsyncpa [#allocation5], 1
    %s602 = scalar_lea.sflag [#allocation5], 1
    %603 = vsyncpa %s602, 1
    %604 = vsyncpa [#allocation7], 1

</llo_original>
